<compile_context>
chip_gen: v6e
topology: v6e:2x2x1
jax: 0.10.0
libtpu: 0.0.40
codegen_flags: <defaults>
</compile_context>

<pallas_src>
import functools

import jax
import jax.numpy as jnp
from jax import lax
from jax.experimental import pallas as pl
from jax.experimental.pallas import tpu as pltpu

# Dropout rates from the original d2l script (dropout1 / dropout2 globals).
DROPOUT1 = 0.2
DROPOUT2 = 0.5

_LANE = 128
_SUBLANE = 8


def _round_up(n, m):
    return ((n + m - 1) // m) * m


def _keep_mask(shape, p, seed_u32, salt):
    """Bernoulli(1-p) keep-mask from a stateless integer hash (lowbias32-style).

    Only plain integer VPU ops: broadcasted_iota, mul, add, xor, shift, and an
    unsigned threshold compare. No stateful TPU PRNG primitives.
    """
    threshold = jnp.uint32(min(int(p * 4294967296.0), 0xFFFFFFFF))
    row = lax.broadcasted_iota(jnp.int32, shape, 0).astype(jnp.uint32)
    col = lax.broadcasted_iota(jnp.int32, shape, 1).astype(jnp.uint32)
    z = (row * jnp.uint32(0xC2B2AE35)
         + col * jnp.uint32(0x27D4EB2F)
         + seed_u32
         + jnp.uint32(salt))
    z = z ^ (z >> 16)
    z = z * jnp.uint32(0x7FEB352D)
    z = z ^ (z >> 15)
    z = z * jnp.uint32(0x846CA68B)
    z = z ^ (z >> 16)
    return z > threshold


def _dropout(h, p, seed_u32, salt):
    # Mirrors dropout_layer(X, p): mask = (rand > p); mask * X / (1 - p)
    if p <= 0.0:
        return h
    if p >= 1.0:
        return jnp.zeros_like(h)
    keep = _keep_mask(h.shape, p, seed_u32, salt)
    return jnp.where(keep, h * jnp.float32(1.0 / (1.0 - p)), jnp.float32(0.0))


def _mlp_dropout_kernel(seed_ref, x_ref, w1_ref, b1_ref, w2_ref, b2_ref,
                        w3_ref, b3_ref, out_ref, *, is_training):
    # Per-tile seed: mix the user seed with the grid position so every batch
    # tile (and megacore shard) draws a distinct dropout mask.
    seed_u32 = (seed_ref[0].astype(jnp.uint32) * jnp.uint32(0x9E3779B9)
                ^ pl.program_id(0).astype(jnp.uint32) * jnp.uint32(0x85EBCA6B))

    x = x_ref[...]                                          # bf16 (tile_b, in_p)

    # Layer 1: bf16 operands on the MXU, f32 accumulation, f32 elementwise tail.
    h1 = jnp.dot(x, w1_ref[...], preferred_element_type=jnp.float32) + b1_ref[...]
    h1 = jnp.maximum(h1, 0.0)                               # ReLU
    if is_training:
        h1 = _dropout(h1, DROPOUT1, seed_u32, salt=0x68BC21EB)

    h2 = jnp.dot(h1.astype(jnp.bfloat16), w2_ref[...],
                 preferred_element_type=jnp.float32) + b2_ref[...]
    h2 = jnp.maximum(h2, 0.0)                               # ReLU
    if is_training:
        h2 = _dropout(h2, DROPOUT2, seed_u32, salt=0x02E5BE93)

    out_ref[...] = jnp.dot(h2.astype(jnp.bfloat16), w3_ref[...],
                           preferred_element_type=jnp.float32) + b3_ref[...]


def net_forward(x, params, seed, num_inputs, *, is_training=True, tile_b_max=256):
    """Forward pass of `Net`. Weights are stored (in_features, out_features)."""
    w1, b1, w2, b2, w3, b3 = params
    x2d = x.reshape((-1, num_inputs)).astype(jnp.float32)
    batch = x2d.shape[0]
    h1_dim, h2_dim, out_dim = w1.shape[1], w2.shape[1], w3.shape[1]

    # Lane-dense padding of every feature axis.
    in_p = _round_up(num_inputs, _LANE)
    h1_p = _round_up(h1_dim, _LANE)
    h2_p = _round_up(h2_dim, _LANE)
    out_p = _round_up(out_dim, _LANE)

    # Batch tiling (tile_b multiple of the f32 sublane count).
    tile_b = min(tile_b_max, _round_up(batch, _SUBLANE))
    batch_p = _round_up(batch, tile_b)
    grid = (batch_p // tile_b,)

    def pad2(a, r, c, dtype):
        buf = jnp.zeros((r, c), dtype)
        return buf.at[:a.shape[0], :a.shape[1]].set(a.astype(dtype))

    xp = pad2(x2d, batch_p, in_p, jnp.bfloat16)
    w1p = pad2(w1, in_p, h1_p, jnp.bfloat16)
    w2p = pad2(w2, h1_p, h2_p, jnp.bfloat16)
    w3p = pad2(w3, h2_p, out_p, jnp.bfloat16)
    b1p = pad2(b1, 1, h1_p, jnp.float32)
    b2p = pad2(b2, 1, h2_p, jnp.float32)
    b3p = pad2(b3, 1, out_p, jnp.float32)

    seed_arr = jnp.asarray([seed], dtype=jnp.int32)

    flops = 2 * batch_p * (in_p * h1_p + h1_p * h2_p + h2_p * out_p)
    bytes_accessed = (xp.size * 2 + w1p.size * 2 + w2p.size * 2 + w3p.size * 2
                      + (b1p.size + b2p.size + b3p.size) * 4
                      + batch_p * out_p * 4)

    kernel = functools.partial(_mlp_dropout_kernel, is_training=is_training)

    out_padded = pl.pallas_call(
        kernel,
        out_shape=jax.ShapeDtypeStruct((batch_p, out_p), jnp.float32),
        grid=grid,
        in_specs=[
            pl.BlockSpec(memory_space=pltpu.MemorySpace.SMEM),      # seed scalar
            pl.BlockSpec((tile_b, in_p), lambda i: (i, 0)),         # x tile
            pl.BlockSpec((in_p, h1_p), lambda i: (0, 0)),           # resident weights
            pl.BlockSpec((1, h1_p), lambda i: (0, 0)),
            pl.BlockSpec((h1_p, h2_p), lambda i: (0, 0)),
            pl.BlockSpec((1, h2_p), lambda i: (0, 0)),
            pl.BlockSpec((h2_p, out_p), lambda i: (0, 0)),
            pl.BlockSpec((1, out_p), lambda i: (0, 0)),
        ],
        out_specs=pl.BlockSpec((tile_b, out_p), lambda i: (i, 0)),
        compiler_params=pltpu.CompilerParams(
            dimension_semantics=("parallel",)),
        cost_estimate=pl.CostEstimate(
            flops=flops, transcendentals=0, bytes_accessed=bytes_accessed),
    )(seed_arr, xp, w1p, b1p, w2p, b2p, w3p, b3p)

    return out_padded[:batch, :out_dim]


def init_params(key, num_inputs, num_outputs, num_hiddens1, num_hiddens2):
    """Deterministic synthetic init (Linear-like); weights stored (in, out)."""
    k1, k2, k3, k4, k5, k6 = jax.random.split(key, 6)

    def lin(kw, kb, fan_in, fan_out):
        bound = 1.0 / jnp.sqrt(fan_in)
        w = jax.random.uniform(kw, (fan_in, fan_out), jnp.float32, -bound, bound)
        b = jax.random.uniform(kb, (1, fan_out), jnp.float32, -bound, bound)
        return w, b

    w1, b1 = lin(k1, k2, num_inputs, num_hiddens1)
    w2, b2 = lin(k3, k4, num_hiddens1, num_hiddens2)
    w3, b3 = lin(k5, k6, num_hiddens2, num_outputs)
    return (w1, b1, w2, b2, w3, b3)


def _reference_eval(x2d, params):
    """Pure-JAX reference of the eval-mode forward (dropout off), bf16 matmuls."""
    w1, b1, w2, b2, w3, b3 = params

    def mm(a, w):
        return jnp.dot(a.astype(jnp.bfloat16), w.astype(jnp.bfloat16),
                       preferred_element_type=jnp.float32)

    h1 = jnp.maximum(mm(x2d, w1) + b1, 0.0)
    h2 = jnp.maximum(mm(h1, w2) + b2, 0.0)
    return mm(h2, w3) + b3


if __name__ == "__main__":
    # Small shapes consistent with the module: MLP over flattened features.
    batch = 8
    num_inputs = 32
    num_hiddens1 = 64
    num_hiddens2 = 64
    num_outputs = 16

    key = jax.random.PRNGKey(0)
    kx, kp = jax.random.split(key)
    x = jax.random.normal(kx, (batch, num_inputs), dtype=jnp.float32)
    params = init_params(kp, num_inputs, num_outputs, num_hiddens1, num_hiddens2)

    # Eval-mode (dropout off) sanity check against a pure-JAX reference.
    out_eval = net_forward(x, params, seed=0, num_inputs=num_inputs,
                           is_training=False)
    out_eval = jax.block_until_ready(out_eval)
    ref_eval = _reference_eval(x.reshape((-1, num_inputs)), params)
    assert out_eval.shape == (batch, num_outputs)
    assert jnp.allclose(out_eval, ref_eval, atol=1e-1, rtol=1e-1)

    # Training-mode forward (the Net's default path, with both dropouts).
    out = net_forward(x, params, seed=0, num_inputs=num_inputs, is_training=True)
    out = jax.block_until_ready(out)
    assert out.shape == (batch, num_outputs)
    assert bool(jnp.all(jnp.isfinite(out)))
    print("KERNEL_OK")
</pallas_src>

<mosaic_0001>
module attributes {stable_mosaic.version = 11 : i64} {
  func.func @_mlp_dropout_kernel(%arg0: i32, %arg1: memref<1xi32, #tpu.memory_space<smem>>, %arg2: memref<8x128xbf16, #tpu.memory_space<vmem>>, %arg3: memref<128x128xbf16, #tpu.memory_space<vmem>>, %arg4: memref<1x128xf32, #tpu.memory_space<vmem>>, %arg5: memref<128x128xbf16, #tpu.memory_space<vmem>>, %arg6: memref<1x128xf32, #tpu.memory_space<vmem>>, %arg7: memref<128x128xbf16, #tpu.memory_space<vmem>>, %arg8: memref<1x128xf32, #tpu.memory_space<vmem>>, %arg9: memref<8x128xf32, #tpu.memory_space<vmem>>) attributes {dimension_semantics = [#tpu.dimension_semantics<parallel>], iteration_bounds = array<i64: 1>, scalar_prefetch = 0 : i64, scratch_operands = 0 : i64, tpu.core_type = #tpu.core_type<tc>, window_params = [{transform_indices = @transform_0, window_bounds = array<i64: 1>}, {transform_indices = @transform_1, window_bounds = array<i64: 8, 128>}, {pipeline_mode = #tpu.pipeline_mode<synchronous>, transform_indices = @transform_2, window_bounds = array<i64: 128, 128>}, {pipeline_mode = #tpu.pipeline_mode<synchronous>, transform_indices = @transform_3, window_bounds = array<i64: 1, 128>}, {pipeline_mode = #tpu.pipeline_mode<synchronous>, transform_indices = @transform_4, window_bounds = array<i64: 128, 128>}, {pipeline_mode = #tpu.pipeline_mode<synchronous>, transform_indices = @transform_5, window_bounds = array<i64: 1, 128>}, {pipeline_mode = #tpu.pipeline_mode<synchronous>, transform_indices = @transform_6, window_bounds = array<i64: 128, 128>}, {pipeline_mode = #tpu.pipeline_mode<synchronous>, transform_indices = @transform_7, window_bounds = array<i64: 1, 128>}, {transform_indices = @transform_8, window_bounds = array<i64: 8, 128>}]} {
    %c0 = arith.constant 0 : index
    %c0_0 = arith.constant 0 : index
    %0 = vector.load %arg2[%c0, %c0_0] : memref<8x128xbf16, #tpu.memory_space<vmem>>, vector<8x128xbf16>
    %c0_1 = arith.constant 0 : index
    %c0_2 = arith.constant 0 : index
    %1 = vector.load %arg3[%c0_1, %c0_2] : memref<128x128xbf16, #tpu.memory_space<vmem>>, vector<128x128xbf16>
    %cst = arith.constant dense<0.000000e+00> : vector<8x128xf32>
    %2 = tpu.matmul %0, %1, %cst {dimension_numbers = #tpu.dot_dimension_numbers<[1], [0], [0], [1], [0, 0, 1, 1], [], []>} : vector<8x128xbf16>, vector<128x128xbf16>, vector<8x128xf32> -> vector<8x128xf32>
    %c0_3 = arith.constant 0 : index
    %c0_4 = arith.constant 0 : index
    %3 = vector.load %arg4[%c0_3, %c0_4] : memref<1x128xf32, #tpu.memory_space<vmem>>, vector<1x128xf32>
    %4 = vector.broadcast %3 : vector<1x128xf32> to vector<8x128xf32>
    %5 = arith.addf %2, %4 : vector<8x128xf32>
    %cst_5 = arith.constant 0.000000e+00 : f32
    %6 = vector.broadcast %cst_5 : f32 to vector<8x128xf32>
    %7 = arith.maximumf %5, %6 : vector<8x128xf32>
    %8 = arith.truncf %7 : vector<8x128xf32> to vector<8x128xbf16>
    %c0_6 = arith.constant 0 : index
    %c0_7 = arith.constant 0 : index
    %9 = vector.load %arg5[%c0_6, %c0_7] : memref<128x128xbf16, #tpu.memory_space<vmem>>, vector<128x128xbf16>
    %cst_8 = arith.constant dense<0.000000e+00> : vector<8x128xf32>
    %10 = tpu.matmul %8, %9, %cst_8 {dimension_numbers = #tpu.dot_dimension_numbers<[1], [0], [0], [1], [0, 0, 1, 1], [], []>} : vector<8x128xbf16>, vector<128x128xbf16>, vector<8x128xf32> -> vector<8x128xf32>
    %c0_9 = arith.constant 0 : index
    %c0_10 = arith.constant 0 : index
    %11 = vector.load %arg6[%c0_9, %c0_10] : memref<1x128xf32, #tpu.memory_space<vmem>>, vector<1x128xf32>
    %12 = vector.broadcast %11 : vector<1x128xf32> to vector<8x128xf32>
    %13 = arith.addf %10, %12 : vector<8x128xf32>
    %cst_11 = arith.constant 0.000000e+00 : f32
    %14 = vector.broadcast %cst_11 : f32 to vector<8x128xf32>
    %15 = arith.maximumf %13, %14 : vector<8x128xf32>
    %16 = arith.truncf %15 : vector<8x128xf32> to vector<8x128xbf16>
    %c0_12 = arith.constant 0 : index
    %c0_13 = arith.constant 0 : index
    %17 = vector.load %arg7[%c0_12, %c0_13] : memref<128x128xbf16, #tpu.memory_space<vmem>>, vector<128x128xbf16>
    %cst_14 = arith.constant dense<0.000000e+00> : vector<8x128xf32>
    %18 = tpu.matmul %16, %17, %cst_14 {dimension_numbers = #tpu.dot_dimension_numbers<[1], [0], [0], [1], [0, 0, 1, 1], [], []>} : vector<8x128xbf16>, vector<128x128xbf16>, vector<8x128xf32> -> vector<8x128xf32>
    %c0_15 = arith.constant 0 : index
    %c0_16 = arith.constant 0 : index
    %19 = vector.load %arg8[%c0_15, %c0_16] : memref<1x128xf32, #tpu.memory_space<vmem>>, vector<1x128xf32>
    %20 = vector.broadcast %19 : vector<1x128xf32> to vector<8x128xf32>
    %21 = arith.addf %18, %20 : vector<8x128xf32>
    %c0_17 = arith.constant 0 : index
    %c0_18 = arith.constant 0 : index
    %22 = vector.load %arg9[%c0_17, %c0_18] : memref<8x128xf32, #tpu.memory_space<vmem>>, vector<8x128xf32>
    tpu.vector_store %arg9[%c0_17, %c0_18], %21 {strides = array<i32>} : memref<8x128xf32, #tpu.memory_space<vmem>>, vector<8x128xf32>,
    return
  }
  func.func @transform_0(%arg0: i32) -> i32 {
    %c0_i32 = arith.constant 0 : i32
    %c0_i32_0 = arith.constant 0 : i32
    return %c0_i32 : i32
  }
  func.func @transform_1(%arg0: i32) -> (i32, i32) {
    %c0_i32 = arith.constant 0 : i32
    %c0_i32_0 = arith.constant 0 : i32
    return %arg0, %c0_i32 : i32, i32
  }
  func.func @transform_2(%arg0: i32) -> (i32, i32) {
    %c0_i32 = arith.constant 0 : i32
    %c0_i32_0 = arith.constant 0 : i32
    %c0_i32_1 = arith.constant 0 : i32
    return %c0_i32, %c0_i32_0 : i32, i32
  }
  func.func @transform_3(%arg0: i32) -> (i32, i32) {
    %c0_i32 = arith.constant 0 : i32
    %c0_i32_0 = arith.constant 0 : i32
    %c0_i32_1 = arith.constant 0 : i32
    return %c0_i32, %c0_i32_0 : i32, i32
  }
  func.func @transform_4(%arg0: i32) -> (i32, i32) {
    %c0_i32 = arith.constant 0 : i32
    %c0_i32_0 = arith.constant 0 : i32
    %c0_i32_1 = arith.constant 0 : i32
    return %c0_i32, %c0_i32_0 : i32, i32
  }
  func.func @transform_5(%arg0: i32) -> (i32, i32) {
    %c0_i32 = arith.constant 0 : i32
    %c0_i32_0 = arith.constant 0 : i32
    %c0_i32_1 = arith.constant 0 : i32
    return %c0_i32, %c0_i32_0 : i32, i32
  }
  func.func @transform_6(%arg0: i32) -> (i32, i32) {
    %c0_i32 = arith.constant 0 : i32
    %c0_i32_0 = arith.constant 0 : i32
    %c0_i32_1 = arith.constant 0 : i32
    return %c0_i32, %c0_i32_0 : i32, i32
  }
  func.func @transform_7(%arg0: i32) -> (i32, i32) {
    %c0_i32 = arith.constant 0 : i32
    %c0_i32_0 = arith.constant 0 : i32
    %c0_i32_1 = arith.constant 0 : i32
    return %c0_i32, %c0_i32_0 : i32, i32
  }
  func.func @transform_8(%arg0: i32) -> (i32, i32) {
    %c0_i32 = arith.constant 0 : i32
    %c0_i32_0 = arith.constant 0 : i32
    return %arg0, %c0_i32 : i32, i32
  }
}

</mosaic_0001>

<llo_original>
// kernel: tpu_custom_call.1
$region0: #{tpu_custom_call.1}
  #allocation0 [shape = 'u32[]', space=smem, size = 0x4, offset = 0x4, fixed_abs, tag = 'smem constant byte address 0x4 - core index']
  #allocation1 [shape = 'u32[144,128]{1,0:T(1,128)}', space=vmem, size = 0x12000, scoped, tag = 'internal scratch']
  #allocation2 [shape = 's32[1]{0:T(128)S(6)}', space=smem, size = 0x200, scoped, tag = 'scoped memory for tpu_custom_call.1']
  %s0 = inlined_call_operand.<no memory space> [shape: s32[1], index: 0, kind: input, shape index: {}]
  %s1 = inlined_call_operand.hbm [shape: bf16[8,128], index: 1, kind: input, shape index: {}]
  %s2 = inlined_call_operand.hbm [shape: bf16[128,128], index: 2, kind: input, shape index: {}]
  %s3 = inlined_call_operand.vmem [shape: f32[1,128], index: 3, kind: input, shape index: {}]
  %s4 = inlined_call_operand.hbm [shape: bf16[128,128], index: 4, kind: input, shape index: {}]
  %s5 = inlined_call_operand.vmem [shape: f32[1,128], index: 5, kind: input, shape index: {}]
  %s6 = inlined_call_operand.hbm [shape: bf16[128,128], index: 6, kind: input, shape index: {}]
  %s7 = inlined_call_operand.vmem [shape: f32[1,128], index: 7, kind: input, shape index: {}]
  %s8 = inlined_call_operand.hbm [shape: f32[8,128], index: 8, kind: output, shape index: {}]
  %s9 = sld [smem:[#allocation0]]
  $region58: #{tpu_custom_call.1} parent=0
    _
  %s11 = ssub.s32 1, %s9
  %s12 = scalar_select 0, %s11, %s9
  %13 = sst [smem:[#allocation2]] %s0
  $region1: #{tpu_custom_call.1} parent=0
    #allocation3 [shape = 'u8[2048]{0}', space=vmem, size = 0x800, scoped, tag = 'input window, operand 1, single buffered']
    #allocation4 [shape = 's32[1]{0}', space=sflag, size = 0x4, scoped, tag = 'scoped memory for tpu_custom_call.1']
    #allocation5 [shape = 's32[1]{0}', space=sflag, size = 0x4, scoped, tag = 'scoped memory for tpu_custom_call.1']
    #allocation6 [shape = 'u8[32768]{0}', space=vmem, size = 0x8000, scoped, tag = 'input window, operand 2, single buffered']
    #allocation7 [shape = 's32[1]{0}', space=sflag, size = 0x4, scoped, tag = 'scoped memory for tpu_custom_call.1']
    #allocation8 [shape = 'u8[32768]{0}', space=vmem, size = 0x8000, scoped, tag = 'input window, operand 4, single buffered']
    #allocation9 [shape = 'u8[32768]{0}', space=vmem, size = 0x8000, scoped, tag = 'input window, operand 6, single buffered']
    #allocation10 [shape = 's32[1]{0}', space=sflag, size = 0x4, scoped, tag = 'scoped memory for tpu_custom_call.1']
    #allocation11 [shape = 'u8[4096]{0}', space=vmem, size = 0x1000, scoped, tag = 'output window, operand 0, single buffered']
    %14 = vsyncpa [#allocation4], 0
    %15 = vsyncpa [#allocation7], 0
    %16 = vsyncpa [#allocation10], 0
    %17 = vsyncpa [#allocation5], 0
    // Predicated region
    $region2: #{tpu_custom_call.1} parent=1 // pred_check
      _
    $region3: #{tpu_custom_call.1} parent=1 // pred_check_branch
      %19 = sbr.rel (0) target = $region5
    $region4: #{tpu_custom_call.1} parent=1 // pred_region
      _
    $region5: #{tpu_custom_call.1} parent=1 // pred_fallthru
      _
    // Predicated region
    $region6: #{tpu_custom_call.1} parent=1 // pred_check
      _
    $region7: #{tpu_custom_call.1} parent=1 // pred_check_branch
      %21 = sbr.rel (0) target = $region9
    $region8: #{tpu_custom_call.1} parent=1 // pred_region
      %s23 = ssub.s32 64, 64
      %24 = vsyncadd [#allocation4], %s23
      %s26 = sshll.u32 [#allocation3], 4
      %s27 = int_to_ptr.vmem [resolvable:$true] %s26
      %29 = dma.hbm_to_vmem [thread:$0]  %s1, 64, %s27, [#allocation4]
    $region9: #{tpu_custom_call.1} parent=1 // pred_fallthru
      _
    // Predicated region
    $region10: #{tpu_custom_call.1} parent=1 // pred_check
      _
    $region11: #{tpu_custom_call.1} parent=1 // pred_check_branch
      %31 = sbr.rel (0) target = $region13
    $region12: #{tpu_custom_call.1} parent=1 // pred_region
      %s33 = ssub.s32 1024, 1024
      %34 = vsyncadd [#allocation7], %s33
      %s35 = sshll.u32 [#allocation6], 4
      %s36 = int_to_ptr.vmem [resolvable:$true] %s35
      %41 = dma.hbm_to_vmem [thread:$0]  %s2, 1024, %s36, [#allocation7], 64, 64, 4
    $region13: #{tpu_custom_call.1} parent=1 // pred_fallthru
      _
    // Predicated region
    $region14: #{tpu_custom_call.1} parent=1 // pred_check
      _
    $region15: #{tpu_custom_call.1} parent=1 // pred_check_branch
      %43 = sbr.rel (0) target = $region17
    $region16: #{tpu_custom_call.1} parent=1 // pred_region
      _
    $region17: #{tpu_custom_call.1} parent=1 // pred_fallthru
      _
    // Predicated region
    $region18: #{tpu_custom_call.1} parent=1 // pred_check
      _
    $region19: #{tpu_custom_call.1} parent=1 // pred_check_branch
      %45 = sbr.rel (0) target = $region21
    $region20: #{tpu_custom_call.1} parent=1 // pred_region
      %s47 = ssub.s32 1024, 1024
      %48 = vsyncadd [#allocation7], %s47
      %s49 = sshll.u32 [#allocation8], 4
      %s50 = int_to_ptr.vmem [resolvable:$true] %s49
      %55 = dma.hbm_to_vmem [thread:$0]  %s4, 1024, %s50, [#allocation7], 64, 64, 4
    $region21: #{tpu_custom_call.1} parent=1 // pred_fallthru
      _
    // Predicated region
    $region22: #{tpu_custom_call.1} parent=1 // pred_check
      _
    $region23: #{tpu_custom_call.1} parent=1 // pred_check_branch
      %57 = sbr.rel (0) target = $region25
    $region24: #{tpu_custom_call.1} parent=1 // pred_region
      _
    $region25: #{tpu_custom_call.1} parent=1 // pred_fallthru
      _
    // Predicated region
    $region26: #{tpu_custom_call.1} parent=1 // pred_check
      _
    $region27: #{tpu_custom_call.1} parent=1 // pred_check_branch
      %59 = sbr.rel (0) target = $region29
    $region28: #{tpu_custom_call.1} parent=1 // pred_region
      %s61 = ssub.s32 1024, 1024
      %62 = vsyncadd [#allocation10], %s61
      %s63 = sshll.u32 [#allocation9], 4
      %s64 = int_to_ptr.vmem [resolvable:$true] %s63
      %69 = dma.hbm_to_vmem [thread:$0]  %s6, 1024, %s64, [#allocation10], 64, 64, 4
    $region29: #{tpu_custom_call.1} parent=1 // pred_fallthru
      _
    // Predicated region
    $region30: #{tpu_custom_call.1} parent=1 // pred_check
      _
    $region31: #{tpu_custom_call.1} parent=1 // pred_check_branch
      %71 = sbr.rel (0) target = $region33
    $region32: #{tpu_custom_call.1} parent=1 // pred_region
      _
    $region33: #{tpu_custom_call.1} parent=1 // pred_fallthru
      _
    // Predicated region
    $region34: #{tpu_custom_call.1} parent=1 // pred_check
      _
    $region35: #{tpu_custom_call.1} parent=1 // pred_check_branch
      %73 = sbr.rel (0) target = $region37
    $region36: #{tpu_custom_call.1} parent=1 // pred_region
      %74 = dma.done [#allocation4], 64
    $region37: #{tpu_custom_call.1} parent=1 // pred_fallthru
      _
    // Predicated region
    $region38: #{tpu_custom_call.1} parent=1 // pred_check
      _
    $region39: #{tpu_custom_call.1} parent=1 // pred_check_branch
      %76 = sbr.rel (0) target = $region41
    $region40: #{tpu_custom_call.1} parent=1 // pred_region
      %77 = dma.done [#allocation7], 1024
    $region41: #{tpu_custom_call.1} parent=1 // pred_fallthru
      _
    // Predicated region
    $region42: #{tpu_custom_call.1} parent=1 // pred_check
      _
    $region43: #{tpu_custom_call.1} parent=1 // pred_check_branch
      %79 = sbr.rel (0) target = $region45
    $region44: #{tpu_custom_call.1} parent=1 // pred_region
      %80 = dma.done [#allocation7], 1024
    $region45: #{tpu_custom_call.1} parent=1 // pred_fallthru
      _
    // Predicated region
    $region46: #{tpu_custom_call.1} parent=1 // pred_check
      _
    $region47: #{tpu_custom_call.1} parent=1 // pred_check_branch
      %82 = sbr.rel (0) target = $region49
    $region48: #{tpu_custom_call.1} parent=1 // pred_region
      %83 = dma.done [#allocation10], 1024
    $region49: #{tpu_custom_call.1} parent=1 // pred_fallthru
      _
    %v85 = vld [vmem:[#allocation3] sm:$0xf]
    %v86 = vld [vmem:[#allocation6] sm:$0xf]
    %v87 = vld [vmem:[#allocation6 + $0x4] sm:$0xf]
    %v88 = vld [vmem:[#allocation6 + $0x8] sm:$0xf]
    %v89 = vld [vmem:[#allocation6 + $0xc] sm:$0xf]
    %v90 = vld [vmem:[#allocation6 + $0x10] sm:$0xf]
    %v91 = vld [vmem:[#allocation6 + $0x14] sm:$0xf]
    %v92 = vld [vmem:[#allocation6 + $0x18] sm:$0xf]
    %v93 = vld [vmem:[#allocation6 + $0x1c] sm:$0xf]
    %v94 = vld [vmem:[#allocation6 + $0x20] sm:$0xf]
    %v95 = vld [vmem:[#allocation6 + $0x24] sm:$0xf]
    %v96 = vld [vmem:[#allocation6 + $0x28] sm:$0xf]
    %v97 = vld [vmem:[#allocation6 + $0x2c] sm:$0xf]
    %v98 = vld [vmem:[#allocation6 + $0x30] sm:$0xf]
    %v99 = vld [vmem:[#allocation6 + $0x34] sm:$0xf]
    %v100 = vld [vmem:[#allocation6 + $0x38] sm:$0xf]
    %v101 = vld [vmem:[#allocation6 + $0x3c] sm:$0xf]
    %v102 = vld [vmem:[%s3] sm:$0x1]
    %v104 = vlaneseq
    %v105 = vshrl.u32 %v104, 7
    %v106 = vsub.s32 0, %v105
    %v107 = vrot.slane %v102, %v106
    %v125 = vunpack.c.l.b16 %v86
    %v126 = vunpack.c.l.b16 %v87
    %v127 = vunpack.c.l.b16 %v88
    %v128 = vunpack.c.l.b16 %v89
    %v129 = vunpack.c.l.b16 %v90
    %v130 = vunpack.c.l.b16 %v91
    %v131 = vunpack.c.l.b16 %v92
    %v132 = vunpack.c.l.b16 %v93
    %v133 = vunpack.c.l.b16 %v94
    %v134 = vunpack.c.l.b16 %v95
    %v135 = vunpack.c.l.b16 %v96
    %v136 = vunpack.c.l.b16 %v97
    %v137 = vunpack.c.l.b16 %v98
    %v138 = vunpack.c.l.b16 %v99
    %v139 = vunpack.c.l.b16 %v100
    %v140 = vunpack.c.l.b16 %v101
    %v141 = vpack.c.b16 %v126, %v125
    %v142 = vpack.c.b16 %v128, %v127
    %v143 = vpack.c.b16 %v130, %v129
    %v144 = vpack.c.b16 %v132, %v131
    %v145 = vpack.c.b16 %v134, %v133
    %v146 = vpack.c.b16 %v136, %v135
    %v147 = vpack.c.b16 %v138, %v137
    %v148 = vpack.c.b16 %v140, %v139
    %157 = vmatprep.subr.bf16.mxu0 0
    %158 = vmatpush1.bf16.msra.mxu0 %v148
    %159 = vmatprep.subr.bf16.mxu0 0
    %160 = vmatpush1.bf16.msra.mxu0 %v147
    %161 = vmatprep.subr.bf16.mxu0 0
    %162 = vmatpush1.bf16.msra.mxu0 %v146
    %163 = vmatprep.subr.bf16.mxu0 0
    %164 = vmatpush1.bf16.msra.mxu0 %v145
    %165 = vmatprep.subr.bf16.mxu0 0
    %166 = vmatpush1.bf16.msra.mxu0 %v144
    %167 = vmatprep.subr.bf16.mxu0 0
    %168 = vmatpush1.bf16.msra.mxu0 %v143
    %169 = vmatprep.subr.bf16.mxu0 0
    %170 = vmatpush1.bf16.msra.mxu0 %v142
    %171 = vmatprep.subr.bf16.mxu0 0
    %172 = vmatpush1.bf16.msra.mxu0 %v141
    %173 = vmatprep.subr.bf16.mxu0 0
    %174 = vmatpush2.bf16.msra.mxu0 0
    %175 = vmatprep.subr.bf16.mxu0 0
    %176 = vmatpush2.bf16.msra.mxu0 0
    %177 = vmatprep.subr.bf16.mxu0 0
    %178 = vmatpush2.bf16.msra.mxu0 0
    %179 = vmatprep.subr.bf16.mxu0 0
    %180 = vmatpush2.bf16.msra.mxu0 0
    %181 = vmatprep.subr.bf16.mxu0 0
    %182 = vmatpush2.bf16.msra.mxu0 0
    %183 = vmatprep.subr.bf16.mxu0 0
    %184 = vmatpush2.bf16.msra.mxu0 0
    %185 = vmatprep.subr.bf16.mxu0 0
    %186 = vmatpush2.bf16.msra.mxu0 0
    %187 = vmatprep.subr.bf16.mxu0 0
    %188 = vmatpush2.bf16.msra.mxu0 0
    %189 = vmatprep.mubr.bf16.mxu0 0
    %190 = vmatmul.mubr.bf16.gmra.mxu0 %v85
    %v191 = vpop.f32.mrf.mxu0
    %v192 = vadd.f32 %v107, %v191
    %v193 = vpop.f32.mrf.mxu0
    %v194 = vpop.f32.mrf.mxu0
    %v195 = vpop.f32.mrf.mxu0
    %196 = vdwg.mxu0
    %v197 = vmax.f32 %v192, 0.0
    %v198 = vpack.c.bf16 %v197, %v197
    %v199 = vld [vmem:[#allocation8] sm:$0xf]
    %v200 = vld [vmem:[#allocation8 + $0x4] sm:$0xf]
    %v201 = vld [vmem:[#allocation8 + $0x8] sm:$0xf]
    %v202 = vld [vmem:[#allocation8 + $0xc] sm:$0xf]
    %v203 = vld [vmem:[#allocation8 + $0x10] sm:$0xf]
    %v204 = vld [vmem:[#allocation8 + $0x14] sm:$0xf]
    %v205 = vld [vmem:[#allocation8 + $0x18] sm:$0xf]
    %v206 = vld [vmem:[#allocation8 + $0x1c] sm:$0xf]
    %v207 = vld [vmem:[#allocation8 + $0x20] sm:$0xf]
    %v208 = vld [vmem:[#allocation8 + $0x24] sm:$0xf]
    %v209 = vld [vmem:[#allocation8 + $0x28] sm:$0xf]
    %v210 = vld [vmem:[#allocation8 + $0x2c] sm:$0xf]
    %v211 = vld [vmem:[#allocation8 + $0x30] sm:$0xf]
    %v212 = vld [vmem:[#allocation8 + $0x34] sm:$0xf]
    %v213 = vld [vmem:[#allocation8 + $0x38] sm:$0xf]
    %v214 = vld [vmem:[#allocation8 + $0x3c] sm:$0xf]
    %v215 = vld [vmem:[%s5] sm:$0x1]
    %v217 = vlaneseq
    %v218 = vshrl.u32 %v217, 7
    %v219 = vsub.s32 0, %v218
    %v220 = vrot.slane %v215, %v219
    %v238 = vunpack.c.l.b16 %v199
    %v239 = vunpack.c.l.b16 %v200
    %v240 = vunpack.c.l.b16 %v201
    %v241 = vunpack.c.l.b16 %v202
    %v242 = vunpack.c.l.b16 %v203
    %v243 = vunpack.c.l.b16 %v204
    %v244 = vunpack.c.l.b16 %v205
    %v245 = vunpack.c.l.b16 %v206
    %v246 = vunpack.c.l.b16 %v207
    %v247 = vunpack.c.l.b16 %v208
    %v248 = vunpack.c.l.b16 %v209
    %v249 = vunpack.c.l.b16 %v210
    %v250 = vunpack.c.l.b16 %v211
    %v251 = vunpack.c.l.b16 %v212
    %v252 = vunpack.c.l.b16 %v213
    %v253 = vunpack.c.l.b16 %v214
    %v254 = vpack.c.b16 %v239, %v238
    %v255 = vpack.c.b16 %v241, %v240
    %v256 = vpack.c.b16 %v243, %v242
    %v257 = vpack.c.b16 %v245, %v244
    %v258 = vpack.c.b16 %v247, %v246
    %v259 = vpack.c.b16 %v249, %v248
    %v260 = vpack.c.b16 %v251, %v250
    %v261 = vpack.c.b16 %v253, %v252
    %270 = vmatprep.subr.bf16.mxu0 0
    %271 = vmatpush1.bf16.msra.mxu0 %v261
    %272 = vmatprep.subr.bf16.mxu0 0
    %273 = vmatpush1.bf16.msra.mxu0 %v260
    %274 = vmatprep.subr.bf16.mxu0 0
    %275 = vmatpush1.bf16.msra.mxu0 %v259
    %276 = vmatprep.subr.bf16.mxu0 0
    %277 = vmatpush1.bf16.msra.mxu0 %v258
    %278 = vmatprep.subr.bf16.mxu0 0
    %279 = vmatpush1.bf16.msra.mxu0 %v257
    %280 = vmatprep.subr.bf16.mxu0 0
    %281 = vmatpush1.bf16.msra.mxu0 %v256
    %282 = vmatprep.subr.bf16.mxu0 0
    %283 = vmatpush1.bf16.msra.mxu0 %v255
    %284 = vmatprep.subr.bf16.mxu0 0
    %285 = vmatpush1.bf16.msra.mxu0 %v254
    %286 = vmatprep.subr.bf16.mxu0 0
    %287 = vmatpush2.bf16.msra.mxu0 0
    %288 = vmatprep.subr.bf16.mxu0 0
    %289 = vmatpush2.bf16.msra.mxu0 0
    %290 = vmatprep.subr.bf16.mxu0 0
    %291 = vmatpush2.bf16.msra.mxu0 0
    %292 = vmatprep.subr.bf16.mxu0 0
    %293 = vmatpush2.bf16.msra.mxu0 0
    %294 = vmatprep.subr.bf16.mxu0 0
    %295 = vmatpush2.bf16.msra.mxu0 0
    %296 = vmatprep.subr.bf16.mxu0 0
    %297 = vmatpush2.bf16.msra.mxu0 0
    %298 = vmatprep.subr.bf16.mxu0 0
    %299 = vmatpush2.bf16.msra.mxu0 0
    %300 = vmatprep.subr.bf16.mxu0 0
    %301 = vmatpush2.bf16.msra.mxu0 0
    %302 = vmatprep.mubr.bf16.mxu0 0
    %303 = vmatmul.mubr.bf16.gmra.mxu0 %v198
    %v304 = vpop.f32.mrf.mxu0
    %v305 = vadd.f32 %v220, %v304
    %v306 = vpop.f32.mrf.mxu0
    %v307 = vpop.f32.mrf.mxu0
    %v308 = vpop.f32.mrf.mxu0
    %309 = vdwg.mxu0
    %v310 = vmax.f32 %v305, 0.0
    %v311 = vpack.c.bf16 %v310, %v310
    %v312 = vld [vmem:[#allocation9] sm:$0xf]
    %v313 = vld [vmem:[#allocation9 + $0x4] sm:$0xf]
    %v314 = vld [vmem:[#allocation9 + $0x8] sm:$0xf]
    %v315 = vld [vmem:[#allocation9 + $0xc] sm:$0xf]
    %v316 = vld [vmem:[#allocation9 + $0x10] sm:$0xf]
    %v317 = vld [vmem:[#allocation9 + $0x14] sm:$0xf]
    %v318 = vld [vmem:[#allocation9 + $0x18] sm:$0xf]
    %v319 = vld [vmem:[#allocation9 + $0x1c] sm:$0xf]
    %v320 = vld [vmem:[#allocation9 + $0x20] sm:$0xf]
    %v321 = vld [vmem:[#allocation9 + $0x24] sm:$0xf]
    %v322 = vld [vmem:[#allocation9 + $0x28] sm:$0xf]
    %v323 = vld [vmem:[#allocation9 + $0x2c] sm:$0xf]
    %v324 = vld [vmem:[#allocation9 + $0x30] sm:$0xf]
    %v325 = vld [vmem:[#allocation9 + $0x34] sm:$0xf]
    %v326 = vld [vmem:[#allocation9 + $0x38] sm:$0xf]
    %v327 = vld [vmem:[#allocation9 + $0x3c] sm:$0xf]
    %v328 = vld [vmem:[%s7] sm:$0x1]
    %v330 = vlaneseq
    %v331 = vshrl.u32 %v330, 7
    %v332 = vsub.s32 0, %v331
    %v333 = vrot.slane %v328, %v332
    %v351 = vunpack.c.l.b16 %v312
    %v352 = vunpack.c.l.b16 %v313
    %v353 = vunpack.c.l.b16 %v314
    %v354 = vunpack.c.l.b16 %v315
    %v355 = vunpack.c.l.b16 %v316
    %v356 = vunpack.c.l.b16 %v317
    %v357 = vunpack.c.l.b16 %v318
    %v358 = vunpack.c.l.b16 %v319
    %v359 = vunpack.c.l.b16 %v320
    %v360 = vunpack.c.l.b16 %v321
    %v361 = vunpack.c.l.b16 %v322
    %v362 = vunpack.c.l.b16 %v323
    %v363 = vunpack.c.l.b16 %v324
    %v364 = vunpack.c.l.b16 %v325
    %v365 = vunpack.c.l.b16 %v326
    %v366 = vunpack.c.l.b16 %v327
    %v367 = vpack.c.b16 %v352, %v351
    %v368 = vpack.c.b16 %v354, %v353
    %v369 = vpack.c.b16 %v356, %v355
    %v370 = vpack.c.b16 %v358, %v357
    %v371 = vpack.c.b16 %v360, %v359
    %v372 = vpack.c.b16 %v362, %v361
    %v373 = vpack.c.b16 %v364, %v363
    %v374 = vpack.c.b16 %v366, %v365
    %383 = vmatprep.subr.bf16.mxu0 0
    %384 = vmatpush1.bf16.msra.mxu0 %v374
    %385 = vmatprep.subr.bf16.mxu0 0
    %386 = vmatpush1.bf16.msra.mxu0 %v373
    %387 = vmatprep.subr.bf16.mxu0 0
    %388 = vmatpush1.bf16.msra.mxu0 %v372
    %389 = vmatprep.subr.bf16.mxu0 0
    %390 = vmatpush1.bf16.msra.mxu0 %v371
    %391 = vmatprep.subr.bf16.mxu0 0
    %392 = vmatpush1.bf16.msra.mxu0 %v370
    %393 = vmatprep.subr.bf16.mxu0 0
    %394 = vmatpush1.bf16.msra.mxu0 %v369
    %395 = vmatprep.subr.bf16.mxu0 0
    %396 = vmatpush1.bf16.msra.mxu0 %v368
    %397 = vmatprep.subr.bf16.mxu0 0
    %398 = vmatpush1.bf16.msra.mxu0 %v367
    %399 = vmatprep.subr.bf16.mxu0 0
    %400 = vmatpush2.bf16.msra.mxu0 0
    %401 = vmatprep.subr.bf16.mxu0 0
    %402 = vmatpush2.bf16.msra.mxu0 0
    %403 = vmatprep.subr.bf16.mxu0 0
    %404 = vmatpush2.bf16.msra.mxu0 0
    %405 = vmatprep.subr.bf16.mxu0 0
    %406 = vmatpush2.bf16.msra.mxu0 0
    %407 = vmatprep.subr.bf16.mxu0 0
    %408 = vmatpush2.bf16.msra.mxu0 0
    %409 = vmatprep.subr.bf16.mxu0 0
    %410 = vmatpush2.bf16.msra.mxu0 0
    %411 = vmatprep.subr.bf16.mxu0 0
    %412 = vmatpush2.bf16.msra.mxu0 0
    %413 = vmatprep.subr.bf16.mxu0 0
    %414 = vmatpush2.bf16.msra.mxu0 0
    %415 = vmatprep.mubr.bf16.mxu0 0
    %416 = vmatmul.mubr.bf16.gmra.mxu0 %v311
    %v417 = vpop.f32.mrf.mxu0
    %v418 = vadd.f32 %v333, %v417
    %v419 = vpop.f32.mrf.mxu0
    %v420 = vpop.f32.mrf.mxu0
    %v421 = vpop.f32.mrf.mxu0
    %422 = vdwg.mxu0
    %423 = vst [vmem:[#allocation11] sm:$0xff] %v418
    // Predicated region
    $region50: #{tpu_custom_call.1} parent=1 // pred_check
      _
    $region51: #{tpu_custom_call.1} parent=1 // pred_check_branch
      %425 = sbr.rel (0) target = $region53
    $region52: #{tpu_custom_call.1} parent=1 // pred_region
      %s427 = ssub.s32 128, 128
      %428 = vsyncadd [#allocation5], %s427
      %s430 = sshll.u32 [#allocation11], 4
      %s431 = int_to_ptr.vmem [resolvable:$true] %s430
      %433 = dma.vmem_to_hbm [thread:$0]  %s431, 128, %s8, [#allocation5]
    $region53: #{tpu_custom_call.1} parent=1 // pred_fallthru
      _
    // Predicated region
    $region54: #{tpu_custom_call.1} parent=1 // pred_check
      _
    $region55: #{tpu_custom_call.1} parent=1 // pred_check_branch
      %435 = sbr.rel (0) target = $region57
    $region56: #{tpu_custom_call.1} parent=1 // pred_region
      %436 = dma.done [#allocation5], 128
    $region57: #{tpu_custom_call.1} parent=1 // pred_fallthru
      _
    %437 = vsyncpa [#allocation4], 1
    %438 = vsyncpa [#allocation7], 1
    %439 = vsyncpa [#allocation10], 1
    %440 = vsyncpa [#allocation5], 1

</llo_original>
